<compile_context>
chip_gen: v7x
topology: tpu7x:2x2x1
jax: 0.10.0
libtpu: 0.0.40
codegen_flags: <defaults>
</compile_context>

<pallas_src>
import functools

import jax
import jax.numpy as jnp
from jax import lax
from jax.experimental import pallas as pl
from jax.experimental.pallas import tpu as pltpu  # noqa: F401  (TPU backend assumed)

# ---- module config (small but consistent with the PyTorch MultiHead) ----
BLOCK_SIZE = 128          # max sequence length of the causal (tril) buffer
N_EMBD = 64
HEAD_SIZE = 16
NUM_HEAD = 4
DROPOUT = 0.1


# --------------------------------------------------------------------------
# Pallas kernel
# --------------------------------------------------------------------------
def _multihead_kernel(x_ref, mask_ref, wqkv_ref, bqkv_ref, wp_ref, bp_ref, o_ref,
                      *, num_heads, head_size):
    """Fused multi-head causal attention over batch-folded rows.

    x_ref:    (B*T, C)        activations, batch folded into the row axis
    mask_ref: (B*T, B*T)      block-diagonal causal mask (1.0 keep / 0.0 drop)
    wqkv_ref: (C, 3*NH*HS)    [Q heads | K heads | V heads] fused weights
    bqkv_ref: (1, 3*NH*HS)    matching fused biases
    wp_ref:   (NH*HS, C)      output projection weight
    bp_ref:   (1, C)          output projection bias
    o_ref:    (B*T, C)
    """
    nh, hs = num_heads, head_size
    x = x_ref[...]

    # One wide matmul produces q, k, v for every head at once.
    qkv = jnp.dot(x, wqkv_ref[...], preferred_element_type=jnp.float32) + bqkv_ref[...]

    keep = mask_ref[...] != 0.0
    scale = float(hs) ** -0.5
    neg_big = jnp.float32(-1e30)        # finite "-inf": no NaN risk on masked rows

    head_outs = []
    for h in range(nh):                 # static unroll; per-head scores are tiny
        q = qkv[:, h * hs:(h + 1) * hs]
        k = qkv[:, (nh + h) * hs:(nh + h + 1) * hs]
        v = qkv[:, (2 * nh + h) * hs:(2 * nh + h + 1) * hs]

        # q @ k^T without materializing an explicit transpose.
        s = lax.dot_general(q, k, (((1,), (1,)), ((), ())),
                            preferred_element_type=jnp.float32) * scale
        s = jnp.where(keep, s, neg_big)
        s = s - jnp.max(s, axis=-1, keepdims=True)
        p = jnp.exp(s)
        p = p * pl.reciprocal(jnp.sum(p, axis=-1, keepdims=True), approx=True)
        # TODO(synk): attention-weight dropout skipped (eval semantics).

        head_outs.append(jnp.dot(p, v, preferred_element_type=jnp.float32))

    concat = jnp.concatenate(head_outs, axis=-1)                 # (B*T, NH*HS)
    out = jnp.dot(concat, wp_ref[...], preferred_element_type=jnp.float32) + bp_ref[...]
    # TODO(synk): projection dropout skipped (eval semantics).
    o_ref[...] = out.astype(o_ref.dtype)


# --------------------------------------------------------------------------
# Wrapper
# --------------------------------------------------------------------------
def multihead_attention(x, wqkv, bqkv, wp, bp, *, num_heads, head_size):
    """MultiHead.forward: x (B, T, C) -> (B, T, C)."""
    B, T, C = x.shape
    assert T <= BLOCK_SIZE
    n = B * T

    # Block-diagonal causal mask (equivalent to tril[:T,:T] applied per batch,
    # with cross-batch attention forbidden since batch is folded into rows).
    tril = jnp.tril(jnp.ones((T, T), jnp.float32))
    mask = jnp.kron(jnp.eye(B, dtype=jnp.float32), tril)          # (n, n)

    kernel = functools.partial(_multihead_kernel,
                               num_heads=num_heads, head_size=head_size)
    out = pl.pallas_call(
        kernel,
        out_shape=jax.ShapeDtypeStruct((n, C), x.dtype),
    )(x.reshape(n, C), mask, wqkv, bqkv, wp, bp)
    return out.reshape(B, T, C)


# --------------------------------------------------------------------------
# Parameter init (PyTorch nn.Linear-style uniform init) + weight fusion
# --------------------------------------------------------------------------
def init_params(key, n_embd=N_EMBD, head_size=HEAD_SIZE, num_heads=NUM_HEAD):
    def linear(k, fan_in, fan_out):
        kw, kb = jax.random.split(k)
        bound = 1.0 / float(fan_in) ** 0.5
        w = jax.random.uniform(kw, (fan_in, fan_out), jnp.float32, -bound, bound)
        b = jax.random.uniform(kb, (fan_out,), jnp.float32, -bound, bound)
        return w, b

    keys = jax.random.split(key, 3 * num_heads + 1)
    wq, bq, wk, bk, wv, bv = [], [], [], [], [], []
    for h in range(num_heads):
        w, b = linear(keys[3 * h + 0], n_embd, head_size); wq.append(w); bq.append(b)
        w, b = linear(keys[3 * h + 1], n_embd, head_size); wk.append(w); bk.append(b)
        w, b = linear(keys[3 * h + 2], n_embd, head_size); wv.append(w); bv.append(b)
    wp, bp = linear(keys[-1], num_heads * head_size, n_embd)

    return dict(wq=jnp.stack(wq), bq=jnp.stack(bq),
                wk=jnp.stack(wk), bk=jnp.stack(bk),
                wv=jnp.stack(wv), bv=jnp.stack(bv),
                wp=wp, bp=bp)


def fuse_qkv(params):
    """Pack per-head q/k/v weights into one (C, 3*NH*HS) matrix: [Q | K | V]."""
    def flat_w(w):                       # (NH, C, HS) -> (C, NH*HS), head-major cols
        nh, c, hs = w.shape
        return jnp.transpose(w, (1, 0, 2)).reshape(c, nh * hs)

    def flat_b(b):                       # (NH, HS) -> (1, NH*HS)
        return b.reshape(1, -1)

    wqkv = jnp.concatenate([flat_w(params["wq"]), flat_w(params["wk"]),
                            flat_w(params["wv"])], axis=1)
    bqkv = jnp.concatenate([flat_b(params["bq"]), flat_b(params["bk"]),
                            flat_b(params["bv"])], axis=1)
    return wqkv, bqkv, params["wp"], params["bp"].reshape(1, -1)


# --------------------------------------------------------------------------
# Pure-JAX reference (mirrors the PyTorch MultiHead exactly)
# --------------------------------------------------------------------------
def multihead_reference(x, params):
    nh, _, hs = params["wq"].shape
    B, T, C = x.shape
    tril = jnp.tril(jnp.ones((T, T), bool))
    heads = []
    for h in range(nh):
        q = x @ params["wq"][h] + params["bq"][h]
        k = x @ params["wk"][h] + params["bk"][h]
        v = x @ params["wv"][h] + params["bv"][h]
        wei = jnp.einsum("btd,bsd->bts", q, k) * (float(hs) ** -0.5)
        wei = jnp.where(tril[None, :, :], wei, -jnp.inf)
        wei = jax.nn.softmax(wei, axis=-1)
        heads.append(jnp.einsum("bts,bsd->btd", wei, v))
    cat = jnp.concatenate(heads, axis=-1)
    return cat @ params["wp"] + params["bp"]


if __name__ == "__main__":
    key = jax.random.PRNGKey(0)
    pkey, xkey = jax.random.split(key)
    params = init_params(pkey)

    B, T = 2, 8
    x = jax.random.normal(xkey, (B, T, N_EMBD), jnp.float32)

    wqkv, bqkv, wp, bp = fuse_qkv(params)
    out = multihead_attention(x, wqkv, bqkv, wp, bp,
                              num_heads=NUM_HEAD, head_size=HEAD_SIZE)
    out = jax.block_until_ready(out)

    assert out.shape == (B, T, N_EMBD), out.shape
    assert bool(jnp.all(jnp.isfinite(out)))

    ref = multihead_reference(x, params)
    max_err = float(jnp.max(jnp.abs(out - ref)))
    assert max_err < 2e-2, f"max abs err vs reference: {max_err}"

    print("KERNEL_OK")
</pallas_src>

<mosaic_0001>
module attributes {stable_mosaic.version = 11 : i64} {
  func.func @_multihead_kernel(%arg0: memref<16x64xf32, #tpu.memory_space<vmem>>, %arg1: memref<16x16xf32, #tpu.memory_space<vmem>>, %arg2: memref<64x192xf32, #tpu.memory_space<vmem>>, %arg3: memref<1x192xf32, #tpu.memory_space<vmem>>, %arg4: memref<64x64xf32, #tpu.memory_space<vmem>>, %arg5: memref<1x64xf32, #tpu.memory_space<vmem>>, %arg6: memref<16x64xf32, #tpu.memory_space<vmem>>) attributes {dimension_semantics = [], scalar_prefetch = 0 : i64, scratch_operands = 0 : i64, tpu.core_type = #tpu.core_type<tc>} {
    %c0 = arith.constant 0 : index
    %c0_0 = arith.constant 0 : index
    %0 = vector.load %arg0[%c0, %c0_0] : memref<16x64xf32, #tpu.memory_space<vmem>>, vector<16x64xf32>
    %c0_1 = arith.constant 0 : index
    %c0_2 = arith.constant 0 : index
    %1 = vector.load %arg2[%c0_1, %c0_2] : memref<64x192xf32, #tpu.memory_space<vmem>>, vector<64x192xf32>
    %cst = arith.constant dense<0.000000e+00> : vector<16x192xf32>
    %2 = tpu.matmul %0, %1, %cst {dimension_numbers = #tpu.dot_dimension_numbers<[1], [0], [0], [1], [0, 0, 1, 1], [], []>} : vector<16x64xf32>, vector<64x192xf32>, vector<16x192xf32> -> vector<16x192xf32>
    %c0_3 = arith.constant 0 : index
    %c0_4 = arith.constant 0 : index
    %3 = vector.load %arg3[%c0_3, %c0_4] : memref<1x192xf32, #tpu.memory_space<vmem>>, vector<1x192xf32>
    %4 = vector.broadcast %3 : vector<1x192xf32> to vector<16x192xf32>
    %5 = arith.addf %2, %4 : vector<16x192xf32>
    %c0_5 = arith.constant 0 : index
    %c0_6 = arith.constant 0 : index
    %6 = vector.load %arg1[%c0_5, %c0_6] : memref<16x16xf32, #tpu.memory_space<vmem>>, vector<16x16xf32>
    %cst_7 = arith.constant 0.000000e+00 : f32
    %7 = vector.broadcast %cst_7 : f32 to vector<16x16xf32>
    %8 = arith.cmpf one, %6, %7 : vector<16x16xf32>
    %9 = vector.extract_strided_slice %5 {offsets = [0, 0], sizes = [16, 16], strides = [1, 1]} : vector<16x192xf32> to vector<16x16xf32>
    %10 = vector.extract_strided_slice %5 {offsets = [0, 64], sizes = [16, 16], strides = [1, 1]} : vector<16x192xf32> to vector<16x16xf32>
    %11 = vector.extract_strided_slice %5 {offsets = [0, 128], sizes = [16, 16], strides = [1, 1]} : vector<16x192xf32> to vector<16x16xf32>
    %cst_8 = arith.constant dense<0.000000e+00> : vector<16x16xf32>
    %12 = tpu.matmul %9, %10, %cst_8 {dimension_numbers = #tpu.dot_dimension_numbers<[1], [1], [0], [0], [0, 0, 1, 0], [], []>} : vector<16x16xf32>, vector<16x16xf32>, vector<16x16xf32> -> vector<16x16xf32>
    %cst_9 = arith.constant 2.500000e-01 : f32
    %13 = vector.broadcast %cst_9 : f32 to vector<16x16xf32>
    %14 = arith.mulf %12, %13 : vector<16x16xf32>
    %cst_10 = arith.constant -1.000000e+30 : f32
    %15 = vector.broadcast %cst_10 : f32 to vector<16x16xf32>
    %16 = arith.select %8, %14, %15 : vector<16x16xi1>, vector<16x16xf32>
    %cst_11 = arith.constant dense<0xFF800000> : vector<16xf32>
    %17 = vector.multi_reduction <maximumf>, %16, %cst_11 [1] : vector<16x16xf32> to vector<16xf32>
    %18 = vector.shape_cast %17 : vector<16xf32> to vector<16x1xf32>
    %19 = vector.broadcast %18 : vector<16x1xf32> to vector<16x16xf32>
    %20 = arith.subf %16, %19 : vector<16x16xf32>
    %21 = math.exp %20 : vector<16x16xf32>
    %cst_12 = arith.constant dense<0.000000e+00> : vector<16xf32>
    %22 = vector.multi_reduction <add>, %21, %cst_12 [1] : vector<16x16xf32> to vector<16xf32>
    %23 = vector.shape_cast %22 : vector<16xf32> to vector<16x1xf32>
    %24 = tpu.reciprocal %23 {approx = true} : vector<16x1xf32> -> vector<16x1xf32>
    %25 = vector.broadcast %24 : vector<16x1xf32> to vector<16x16xf32>
    %26 = arith.mulf %21, %25 : vector<16x16xf32>
    %cst_13 = arith.constant dense<0.000000e+00> : vector<16x16xf32>
    %27 = tpu.matmul %26, %11, %cst_13 {dimension_numbers = #tpu.dot_dimension_numbers<[1], [0], [0], [1], [0, 0, 1, 1], [], []>} : vector<16x16xf32>, vector<16x16xf32>, vector<16x16xf32> -> vector<16x16xf32>
    %28 = vector.extract_strided_slice %5 {offsets = [0, 16], sizes = [16, 16], strides = [1, 1]} : vector<16x192xf32> to vector<16x16xf32>
    %29 = vector.extract_strided_slice %5 {offsets = [0, 80], sizes = [16, 16], strides = [1, 1]} : vector<16x192xf32> to vector<16x16xf32>
    %30 = vector.extract_strided_slice %5 {offsets = [0, 144], sizes = [16, 16], strides = [1, 1]} : vector<16x192xf32> to vector<16x16xf32>
    %cst_14 = arith.constant dense<0.000000e+00> : vector<16x16xf32>
    %31 = tpu.matmul %28, %29, %cst_14 {dimension_numbers = #tpu.dot_dimension_numbers<[1], [1], [0], [0], [0, 0, 1, 0], [], []>} : vector<16x16xf32>, vector<16x16xf32>, vector<16x16xf32> -> vector<16x16xf32>
    %cst_15 = arith.constant 2.500000e-01 : f32
    %32 = vector.broadcast %cst_15 : f32 to vector<16x16xf32>
    %33 = arith.mulf %31, %32 : vector<16x16xf32>
    %cst_16 = arith.constant -1.000000e+30 : f32
    %34 = vector.broadcast %cst_16 : f32 to vector<16x16xf32>
    %35 = arith.select %8, %33, %34 : vector<16x16xi1>, vector<16x16xf32>
    %cst_17 = arith.constant dense<0xFF800000> : vector<16xf32>
    %36 = vector.multi_reduction <maximumf>, %35, %cst_17 [1] : vector<16x16xf32> to vector<16xf32>
    %37 = vector.shape_cast %36 : vector<16xf32> to vector<16x1xf32>
    %38 = vector.broadcast %37 : vector<16x1xf32> to vector<16x16xf32>
    %39 = arith.subf %35, %38 : vector<16x16xf32>
    %40 = math.exp %39 : vector<16x16xf32>
    %cst_18 = arith.constant dense<0.000000e+00> : vector<16xf32>
    %41 = vector.multi_reduction <add>, %40, %cst_18 [1] : vector<16x16xf32> to vector<16xf32>
    %42 = vector.shape_cast %41 : vector<16xf32> to vector<16x1xf32>
    %43 = tpu.reciprocal %42 {approx = true} : vector<16x1xf32> -> vector<16x1xf32>
    %44 = vector.broadcast %43 : vector<16x1xf32> to vector<16x16xf32>
    %45 = arith.mulf %40, %44 : vector<16x16xf32>
    %cst_19 = arith.constant dense<0.000000e+00> : vector<16x16xf32>
    %46 = tpu.matmul %45, %30, %cst_19 {dimension_numbers = #tpu.dot_dimension_numbers<[1], [0], [0], [1], [0, 0, 1, 1], [], []>} : vector<16x16xf32>, vector<16x16xf32>, vector<16x16xf32> -> vector<16x16xf32>
    %47 = vector.extract_strided_slice %5 {offsets = [0, 32], sizes = [16, 16], strides = [1, 1]} : vector<16x192xf32> to vector<16x16xf32>
    %48 = vector.extract_strided_slice %5 {offsets = [0, 96], sizes = [16, 16], strides = [1, 1]} : vector<16x192xf32> to vector<16x16xf32>
    %49 = vector.extract_strided_slice %5 {offsets = [0, 160], sizes = [16, 16], strides = [1, 1]} : vector<16x192xf32> to vector<16x16xf32>
    %cst_20 = arith.constant dense<0.000000e+00> : vector<16x16xf32>
    %50 = tpu.matmul %47, %48, %cst_20 {dimension_numbers = #tpu.dot_dimension_numbers<[1], [1], [0], [0], [0, 0, 1, 0], [], []>} : vector<16x16xf32>, vector<16x16xf32>, vector<16x16xf32> -> vector<16x16xf32>
    %cst_21 = arith.constant 2.500000e-01 : f32
    %51 = vector.broadcast %cst_21 : f32 to vector<16x16xf32>
    %52 = arith.mulf %50, %51 : vector<16x16xf32>
    %cst_22 = arith.constant -1.000000e+30 : f32
    %53 = vector.broadcast %cst_22 : f32 to vector<16x16xf32>
    %54 = arith.select %8, %52, %53 : vector<16x16xi1>, vector<16x16xf32>
    %cst_23 = arith.constant dense<0xFF800000> : vector<16xf32>
    %55 = vector.multi_reduction <maximumf>, %54, %cst_23 [1] : vector<16x16xf32> to vector<16xf32>
    %56 = vector.shape_cast %55 : vector<16xf32> to vector<16x1xf32>
    %57 = vector.broadcast %56 : vector<16x1xf32> to vector<16x16xf32>
    %58 = arith.subf %54, %57 : vector<16x16xf32>
    %59 = math.exp %58 : vector<16x16xf32>
    %cst_24 = arith.constant dense<0.000000e+00> : vector<16xf32>
    %60 = vector.multi_reduction <add>, %59, %cst_24 [1] : vector<16x16xf32> to vector<16xf32>
    %61 = vector.shape_cast %60 : vector<16xf32> to vector<16x1xf32>
    %62 = tpu.reciprocal %61 {approx = true} : vector<16x1xf32> -> vector<16x1xf32>
    %63 = vector.broadcast %62 : vector<16x1xf32> to vector<16x16xf32>
    %64 = arith.mulf %59, %63 : vector<16x16xf32>
    %cst_25 = arith.constant dense<0.000000e+00> : vector<16x16xf32>
    %65 = tpu.matmul %64, %49, %cst_25 {dimension_numbers = #tpu.dot_dimension_numbers<[1], [0], [0], [1], [0, 0, 1, 1], [], []>} : vector<16x16xf32>, vector<16x16xf32>, vector<16x16xf32> -> vector<16x16xf32>
    %66 = vector.extract_strided_slice %5 {offsets = [0, 48], sizes = [16, 16], strides = [1, 1]} : vector<16x192xf32> to vector<16x16xf32>
    %67 = vector.extract_strided_slice %5 {offsets = [0, 112], sizes = [16, 16], strides = [1, 1]} : vector<16x192xf32> to vector<16x16xf32>
    %68 = vector.extract_strided_slice %5 {offsets = [0, 176], sizes = [16, 16], strides = [1, 1]} : vector<16x192xf32> to vector<16x16xf32>
    %cst_26 = arith.constant dense<0.000000e+00> : vector<16x16xf32>
    %69 = tpu.matmul %66, %67, %cst_26 {dimension_numbers = #tpu.dot_dimension_numbers<[1], [1], [0], [0], [0, 0, 1, 0], [], []>} : vector<16x16xf32>, vector<16x16xf32>, vector<16x16xf32> -> vector<16x16xf32>
    %cst_27 = arith.constant 2.500000e-01 : f32
    %70 = vector.broadcast %cst_27 : f32 to vector<16x16xf32>
    %71 = arith.mulf %69, %70 : vector<16x16xf32>
    %cst_28 = arith.constant -1.000000e+30 : f32
    %72 = vector.broadcast %cst_28 : f32 to vector<16x16xf32>
    %73 = arith.select %8, %71, %72 : vector<16x16xi1>, vector<16x16xf32>
    %cst_29 = arith.constant dense<0xFF800000> : vector<16xf32>
    %74 = vector.multi_reduction <maximumf>, %73, %cst_29 [1] : vector<16x16xf32> to vector<16xf32>
    %75 = vector.shape_cast %74 : vector<16xf32> to vector<16x1xf32>
    %76 = vector.broadcast %75 : vector<16x1xf32> to vector<16x16xf32>
    %77 = arith.subf %73, %76 : vector<16x16xf32>
    %78 = math.exp %77 : vector<16x16xf32>
    %cst_30 = arith.constant dense<0.000000e+00> : vector<16xf32>
    %79 = vector.multi_reduction <add>, %78, %cst_30 [1] : vector<16x16xf32> to vector<16xf32>
    %80 = vector.shape_cast %79 : vector<16xf32> to vector<16x1xf32>
    %81 = tpu.reciprocal %80 {approx = true} : vector<16x1xf32> -> vector<16x1xf32>
    %82 = vector.broadcast %81 : vector<16x1xf32> to vector<16x16xf32>
    %83 = arith.mulf %78, %82 : vector<16x16xf32>
    %cst_31 = arith.constant dense<0.000000e+00> : vector<16x16xf32>
    %84 = tpu.matmul %83, %68, %cst_31 {dimension_numbers = #tpu.dot_dimension_numbers<[1], [0], [0], [1], [0, 0, 1, 1], [], []>} : vector<16x16xf32>, vector<16x16xf32>, vector<16x16xf32> -> vector<16x16xf32>
    %85 = tpu.concatenate %27, %46, %65, %84 in 1 : vector<16x16xf32>, vector<16x16xf32>, vector<16x16xf32>, vector<16x16xf32> -> vector<16x64xf32>
    %c0_32 = arith.constant 0 : index
    %c0_33 = arith.constant 0 : index
    %86 = vector.load %arg4[%c0_32, %c0_33] : memref<64x64xf32, #tpu.memory_space<vmem>>, vector<64x64xf32>
    %cst_34 = arith.constant dense<0.000000e+00> : vector<16x64xf32>
    %87 = tpu.matmul %85, %86, %cst_34 {dimension_numbers = #tpu.dot_dimension_numbers<[1], [0], [0], [1], [0, 0, 1, 1], [], []>} : vector<16x64xf32>, vector<64x64xf32>, vector<16x64xf32> -> vector<16x64xf32>
    %c0_35 = arith.constant 0 : index
    %c0_36 = arith.constant 0 : index
    %88 = vector.load %arg5[%c0_35, %c0_36] : memref<1x64xf32, #tpu.memory_space<vmem>>, vector<1x64xf32>
    %89 = vector.broadcast %88 : vector<1x64xf32> to vector<16x64xf32>
    %90 = arith.addf %87, %89 : vector<16x64xf32>
    %c0_37 = arith.constant 0 : index
    %c0_38 = arith.constant 0 : index
    %91 = vector.load %arg6[%c0_37, %c0_38] : memref<16x64xf32, #tpu.memory_space<vmem>>, vector<16x64xf32>
    tpu.vector_store %arg6[%c0_37, %c0_38], %90 {strides = array<i32>} : memref<16x64xf32, #tpu.memory_space<vmem>>, vector<16x64xf32>,
    return
  }
}

</mosaic_0001>

<llo_original>
// kernel: tpu_custom_call.1
$region0: #{tpu_custom_call.1}
  #allocation0 [shape = 'u32[]', space=smem, size = 0x4, offset = 0x4, fixed_abs, tag = 'smem constant byte address 0x4 - core index']
  #allocation1 [shape = 'u32[144,128]{1,0:T(1,128)}', space=vmem, size = 0x12000, scoped, tag = 'internal scratch']
  %s0 = inlined_call_operand.hbm [shape: f32[16,64], index: 0, kind: input, shape index: {}]
  %s1 = inlined_call_operand.hbm [shape: f32[16,16], index: 1, kind: input, shape index: {}]
  %s2 = inlined_call_operand.hbm [shape: f32[64,192], index: 2, kind: input, shape index: {}]
  %s3 = inlined_call_operand.vmem [shape: f32[1,192], index: 3, kind: input, shape index: {}]
  %s4 = inlined_call_operand.hbm [shape: f32[64,64], index: 4, kind: input, shape index: {}]
  %s5 = inlined_call_operand.vmem [shape: f32[1,64], index: 5, kind: input, shape index: {}]
  %s6 = inlined_call_operand.hbm [shape: f32[16,64], index: 6, kind: output, shape index: {}]
  %s7 = sld [smem:[#allocation0]]
  $region50: #{tpu_custom_call.1} parent=0
    _
  %s9 = ssub.s32 1, %s7
  %s10 = scalar_select 0, %s9, %s7
  $region1: #{tpu_custom_call.1} parent=0
    #allocation2 [shape = 'u8[8192]{0}', space=vmem, size = 0x2000, scoped, tag = 'input window, operand 0, single buffered']
    #allocation3 [shape = 's32[1]{0}', space=sflag, size = 0x4, scoped, tag = 'scoped memory for tpu_custom_call.1']
    #allocation4 [shape = 's32[1]{0}', space=sflag, size = 0x4, scoped, tag = 'scoped memory for tpu_custom_call.1']
    #allocation5 [shape = 'u8[8192]{0}', space=vmem, size = 0x2000, scoped, tag = 'input window, operand 1, single buffered']
    #allocation6 [shape = 's32[1]{0}', space=sflag, size = 0x4, scoped, tag = 'scoped memory for tpu_custom_call.1']
    #allocation7 [shape = 'u8[65536]{0}', space=vmem, size = 0x10000, scoped, tag = 'input window, operand 2, single buffered']
    #allocation8 [shape = 'u8[32768]{0}', space=vmem, size = 0x8000, scoped, tag = 'input window, operand 4, single buffered']
    #allocation9 [shape = 's32[1]{0}', space=sflag, size = 0x4, scoped, tag = 'scoped memory for tpu_custom_call.1']
    #allocation10 [shape = 'u8[8192]{0}', space=vmem, size = 0x2000, scoped, tag = 'output window, operand 0, single buffered']
    %11 = vsyncpa [#allocation3], 0
    %12 = vsyncpa [#allocation6], 0
    %13 = vsyncpa [#allocation9], 0
    %14 = vsyncpa [#allocation4], 0
    // Predicated region
    $region2: #{tpu_custom_call.1} parent=1 // pred_check
      _
    $region3: #{tpu_custom_call.1} parent=1 // pred_check_branch
      %16 = sbr.rel (0) target = $region5
    $region4: #{tpu_custom_call.1} parent=1 // pred_region
      %s18 = ssub.s32 256, 256
      %19 = vsyncadd [#allocation3], %s18
      %s20 = sshll.u32 [#allocation2], 4
      %s21 = int_to_ptr.vmem [resolvable:$true] %s20
      %26 = dma.hbm_to_vmem [thread:$0]  %s0, 256, %s21, [#allocation3], 128, 128, 8
    $region5: #{tpu_custom_call.1} parent=1 // pred_fallthru
      _
    // Predicated region
    $region6: #{tpu_custom_call.1} parent=1 // pred_check
      _
    $region7: #{tpu_custom_call.1} parent=1 // pred_check_branch
      %28 = sbr.rel (0) target = $region9
    $region8: #{tpu_custom_call.1} parent=1 // pred_region
      %s30 = ssub.s32 256, 256
      %31 = vsyncadd [#allocation6], %s30
      %s32 = sshll.u32 [#allocation5], 4
      %s33 = int_to_ptr.vmem [resolvable:$true] %s32
      %38 = dma.hbm_to_vmem [thread:$0]  %s1, 256, %s33, [#allocation6], 128, 128, 8
    $region9: #{tpu_custom_call.1} parent=1 // pred_fallthru
      _
    // Predicated region
    $region10: #{tpu_custom_call.1} parent=1 // pred_check
      _
    $region11: #{tpu_custom_call.1} parent=1 // pred_check_branch
      %40 = sbr.rel (0) target = $region13
    $region12: #{tpu_custom_call.1} parent=1 // pred_region
      %s42 = ssub.s32 2048, 2048
      %43 = vsyncadd [#allocation6], %s42
      %s44 = sshll.u32 [#allocation7], 4
      %s45 = int_to_ptr.vmem [resolvable:$true] %s44
      %50 = dma.hbm_to_vmem [thread:$0]  %s2, 2048, %s45, [#allocation6], 256, 256, 16
    $region13: #{tpu_custom_call.1} parent=1 // pred_fallthru
      _
    // Predicated region
    $region14: #{tpu_custom_call.1} parent=1 // pred_check
      _
    $region15: #{tpu_custom_call.1} parent=1 // pred_check_branch
      %52 = sbr.rel (0) target = $region17
    $region16: #{tpu_custom_call.1} parent=1 // pred_region
      _
    $region17: #{tpu_custom_call.1} parent=1 // pred_fallthru
      _
    // Predicated region
    $region18: #{tpu_custom_call.1} parent=1 // pred_check
      _
    $region19: #{tpu_custom_call.1} parent=1 // pred_check_branch
      %54 = sbr.rel (0) target = $region21
    $region20: #{tpu_custom_call.1} parent=1 // pred_region
      %s56 = ssub.s32 1024, 1024
      %57 = vsyncadd [#allocation9], %s56
      %s58 = sshll.u32 [#allocation8], 4
      %s59 = int_to_ptr.vmem [resolvable:$true] %s58
      %64 = dma.hbm_to_vmem [thread:$0]  %s4, 1024, %s59, [#allocation9], 128, 128, 8
    $region21: #{tpu_custom_call.1} parent=1 // pred_fallthru
      _
    // Predicated region
    $region22: #{tpu_custom_call.1} parent=1 // pred_check
      _
    $region23: #{tpu_custom_call.1} parent=1 // pred_check_branch
      %66 = sbr.rel (0) target = $region25
    $region24: #{tpu_custom_call.1} parent=1 // pred_region
      _
    $region25: #{tpu_custom_call.1} parent=1 // pred_fallthru
      _
    // Predicated region
    $region26: #{tpu_custom_call.1} parent=1 // pred_check
      _
    $region27: #{tpu_custom_call.1} parent=1 // pred_check_branch
      %68 = sbr.rel (0) target = $region29
    $region28: #{tpu_custom_call.1} parent=1 // pred_region
      %69 = dma.done [#allocation3], 256
    $region29: #{tpu_custom_call.1} parent=1 // pred_fallthru
      _
    // Predicated region
    $region30: #{tpu_custom_call.1} parent=1 // pred_check
      _
    $region31: #{tpu_custom_call.1} parent=1 // pred_check_branch
      %71 = sbr.rel (0) target = $region33
    $region32: #{tpu_custom_call.1} parent=1 // pred_region
      %72 = dma.done [#allocation6], 256
    $region33: #{tpu_custom_call.1} parent=1 // pred_fallthru
      _
    // Predicated region
    $region34: #{tpu_custom_call.1} parent=1 // pred_check
      _
    $region35: #{tpu_custom_call.1} parent=1 // pred_check_branch
      %74 = sbr.rel (0) target = $region37
    $region36: #{tpu_custom_call.1} parent=1 // pred_region
      %75 = dma.done [#allocation6], 2048
    $region37: #{tpu_custom_call.1} parent=1 // pred_fallthru
      _
    // Predicated region
    $region38: #{tpu_custom_call.1} parent=1 // pred_check
      _
    $region39: #{tpu_custom_call.1} parent=1 // pred_check_branch
      %77 = sbr.rel (0) target = $region41
    $region40: #{tpu_custom_call.1} parent=1 // pred_region
      %78 = dma.done [#allocation9], 1024
    $region41: #{tpu_custom_call.1} parent=1 // pred_fallthru
      _
    %v79 = vld [vmem:[#allocation2] sm:$0xff]
    %v80 = vld [vmem:[#allocation2 + $0x8] sm:$0xff]
    %v81 = vld [vmem:[#allocation7] sm:$0xff]
    %v82 = vld [vmem:[#allocation7 + $0x8] sm:$0xff]
    %v83 = vld [vmem:[#allocation7 + $0x10] sm:$0xff]
    %v84 = vld [vmem:[#allocation7 + $0x18] sm:$0xff]
    %v85 = vld [vmem:[#allocation7 + $0x20] sm:$0xff]
    %v86 = vld [vmem:[#allocation7 + $0x28] sm:$0xff]
    %v87 = vld [vmem:[#allocation7 + $0x30] sm:$0xff]
    %v88 = vld [vmem:[#allocation7 + $0x38] sm:$0xff]
    %v89 = vld [vmem:[#allocation7 + $0x40] sm:$0xff]
    %v90 = vld [vmem:[#allocation7 + $0x48] sm:$0xff]
    %v91 = vld [vmem:[#allocation7 + $0x50] sm:$0xff]
    %v92 = vld [vmem:[#allocation7 + $0x58] sm:$0xff]
    %v93 = vld [vmem:[#allocation7 + $0x60] sm:$0xff]
    %v94 = vld [vmem:[#allocation7 + $0x68] sm:$0xff]
    %v95 = vld [vmem:[#allocation7 + $0x70] sm:$0xff]
    %v96 = vld [vmem:[#allocation7 + $0x78] sm:$0xff]
    %v97 = vld [vmem:[%s3] sm:$0x3]
    %v99 = vlaneseq
    %v100 = vshrl.u32 %v99, 7
    %v101 = vsub.s32 0, %v100
    %v102 = vrot.slane %v97, %v101
    %v103 = vlaneseq
    %v104 = vshrl.u32 %v103, 7
    %v105 = vsub.s32 1, %v104
    %v106 = vrot.slane %v97, %v105
    %vm109 = vcmask 523264
    %v111 = vsel %vm109, %v79, 0
    %v114 = vsel %vm109, %v80, 0
    %116 = vmatprep.subr.mxu0 %v82
    %117 = vmatpush1.msra.mxu0 %v81
    %118 = vmatprep.subr.mxu0 %v84
    %119 = vmatpush1.msra.mxu0 %v83
    %120 = vmatprep.subr.mxu0 %v86
    %121 = vmatpush1.msra.mxu0 %v85
    %122 = vmatprep.subr.mxu0 %v88
    %123 = vmatpush1.msra.mxu0 %v87
    %124 = vmatprep.subr.mxu0 %v90
    %125 = vmatpush1.msra.mxu0 %v89
    %126 = vmatprep.subr.mxu0 %v92
    %127 = vmatpush1.msra.mxu0 %v91
    %128 = vmatprep.subr.mxu0 %v94
    %129 = vmatpush1.msra.mxu0 %v93
    %130 = vmatprep.subr.mxu0 %v96
    %131 = vmatpush1.msra.mxu0 %v95
    %132 = vmatprep.subr.mxu0 0.0
    %133 = vmatpush1.msra.mxu0 0.0
    %134 = vmatprep.subr.mxu0 0.0
    %135 = vmatpush1.msra.mxu0 0.0
    %136 = vmatprep.subr.mxu0 0.0
    %137 = vmatpush1.msra.mxu0 0.0
    %138 = vmatprep.subr.mxu0 0.0
    %139 = vmatpush1.msra.mxu0 0.0
    %140 = vmatprep.subr.mxu0 0.0
    %141 = vmatpush1.msra.mxu0 0.0
    %142 = vmatprep.subr.mxu0 0.0
    %143 = vmatpush1.msra.mxu0 0.0
    %144 = vmatprep.subr.mxu0 0.0
    %145 = vmatpush1.msra.mxu0 0.0
    %146 = vmatprep.subr.mxu0 0.0
    %147 = vmatpush1.msra.mxu0 0.0
    %148 = vmatprep.subr.mxu0 0.0
    %149 = vmatpush1.msra.mxu0 0.0
    %150 = vmatprep.subr.mxu0 0.0
    %151 = vmatpush1.msra.mxu0 0.0
    %152 = vmatprep.subr.mxu0 0.0
    %153 = vmatpush1.msra.mxu0 0.0
    %154 = vmatprep.subr.mxu0 0.0
    %155 = vmatpush1.msra.mxu0 0.0
    %156 = vmatprep.subr.mxu0 0.0
    %157 = vmatpush1.msra.mxu0 0.0
    %158 = vmatprep.subr.mxu0 0.0
    %159 = vmatpush1.msra.mxu0 0.0
    %160 = vmatprep.subr.mxu0 0.0
    %161 = vmatpush1.msra.mxu0 0.0
    %162 = vmatprep.subr.mxu0 0.0
    %163 = vmatpush1.msra.mxu0 0.0
    %164 = vmatprep.subr.mxu0 0.0
    %165 = vmatpush1.msra.mxu0 0.0
    %166 = vmatprep.subr.mxu0 0.0
    %167 = vmatpush1.msra.mxu0 0.0
    %168 = vmatprep.subr.mxu0 0.0
    %169 = vmatpush1.msra.mxu0 0.0
    %170 = vmatprep.subr.mxu0 0.0
    %171 = vmatpush1.msra.mxu0 0.0
    %172 = vmatprep.subr.mxu0 0.0
    %173 = vmatpush1.msra.mxu0 0.0
    %174 = vmatprep.subr.mxu0 0.0
    %175 = vmatpush1.msra.mxu0 0.0
    %176 = vmatprep.subr.mxu0 0.0
    %177 = vmatpush1.msra.mxu0 0.0
    %178 = vmatprep.subr.mxu0 0.0
    %179 = vmatpush1.msra.mxu0 0.0
    %180 = vmatprep.mubr.f32.mxu0 0.0
    %181 = vmatmul.mubr.f32.gmra.mrb[0].mxu0 %v111
    %v182 = vpop.f32.mrb[0].mxu0
    %v183 = vadd.f32 %v102, %v182
    %v184 = vpop.f32.mrb[0].mxu0
    %v185 = vadd.f32 %v106, %v184
    %186 = vmatprep.mubr.f32.mxu0 0.0
    %187 = vmatmul.mubr.f32.gmra.mrb[0].mxu0 %v114
    %v188 = vpop.f32.mrb[0].mxu0
    %v189 = vadd.f32 %v102, %v188
    %v190 = vpop.f32.mrb[0].mxu0
    %v191 = vadd.f32 %v106, %v190
    %192 = vdwg.mxu0
    %v193 = vld [vmem:[#allocation5] sm:$0xff]
    %v194 = vld [vmem:[#allocation5 + $0x8] sm:$0xff]
    %vm195 = vcmp.ne.f32.partialorder %v193, 0.0
    %vm196 = vcmp.ne.f32.partialorder %v194, 0.0
    %199 = vrot.lane.b32.xlu0 %v183, 64
    %v200 = vpop.permute.xlu0 %199
    %201 = vrot.lane.b32.xlu0 %v189, 64
    %v202 = vpop.permute.xlu0 %201
    %vm203 = vcmask 130048
    %v204 = vsel %vm203, %v183, 0
    %v206 = vsel %vm203, %v189, 0
    %v208 = vsel %vm203, %v200, 0
    %v210 = vsel %vm203, %v202, 0
    %212 = vmatprep.subr.mxu0 0.0
    %213 = vmatpush1.xpose.msra.mxu0 %v208
    %214 = vmatprep.subr.mxu0 0.0
    %215 = vmatpush1.xpose.msra.mxu0 %v210
    %216 = vmatprep.subr.mxu0 0.0
    %217 = vmatpush1.xpose.msra.mxu0 0.0
    %218 = vmatprep.subr.mxu0 0.0
    %219 = vmatpush1.xpose.msra.mxu0 0.0
    %220 = vmatprep.subr.mxu0 0.0
    %221 = vmatpush1.xpose.msra.mxu0 0.0
    %222 = vmatprep.subr.mxu0 0.0
    %223 = vmatpush1.xpose.msra.mxu0 0.0
    %224 = vmatprep.subr.mxu0 0.0
    %225 = vmatpush1.xpose.msra.mxu0 0.0
    %226 = vmatprep.subr.mxu0 0.0
    %227 = vmatpush1.xpose.msra.mxu0 0.0
    %228 = vmatprep.subr.mxu0 0.0
    %229 = vmatpush1.xpose.msra.mxu0 0.0
    %230 = vmatprep.subr.mxu0 0.0
    %231 = vmatpush1.xpose.msra.mxu0 0.0
    %232 = vmatprep.subr.mxu0 0.0
    %233 = vmatpush1.xpose.msra.mxu0 0.0
    %234 = vmatprep.subr.mxu0 0.0
    %235 = vmatpush1.xpose.msra.mxu0 0.0
    %236 = vmatprep.subr.mxu0 0.0
    %237 = vmatpush1.xpose.msra.mxu0 0.0
    %238 = vmatprep.subr.mxu0 0.0
    %239 = vmatpush1.xpose.msra.mxu0 0.0
    %240 = vmatprep.subr.mxu0 0.0
    %241 = vmatpush1.xpose.msra.mxu0 0.0
    %242 = vmatprep.subr.mxu0 0.0
    %243 = vmatpush1.xpose.msra.mxu0 0.0
    %244 = vmatprep.subr.mxu0 0.0
    %245 = vmatpush1.xpose.msra.mxu0 0.0
    %246 = vmatprep.subr.mxu0 0.0
    %247 = vmatpush1.xpose.msra.mxu0 0.0
    %248 = vmatprep.subr.mxu0 0.0
    %249 = vmatpush1.xpose.msra.mxu0 0.0
    %250 = vmatprep.subr.mxu0 0.0
    %251 = vmatpush1.xpose.msra.mxu0 0.0
    %252 = vmatprep.subr.mxu0 0.0
    %253 = vmatpush1.xpose.msra.mxu0 0.0
    %254 = vmatprep.subr.mxu0 0.0
    %255 = vmatpush1.xpose.msra.mxu0 0.0
    %256 = vmatprep.subr.mxu0 0.0
    %257 = vmatpush1.xpose.msra.mxu0 0.0
    %258 = vmatprep.subr.mxu0 0.0
    %259 = vmatpush1.xpose.msra.mxu0 0.0
    %260 = vmatprep.subr.mxu0 0.0
    %261 = vmatpush1.xpose.msra.mxu0 0.0
    %262 = vmatprep.subr.mxu0 0.0
    %263 = vmatpush1.xpose.msra.mxu0 0.0
    %264 = vmatprep.subr.mxu0 0.0
    %265 = vmatpush1.xpose.msra.mxu0 0.0
    %266 = vmatprep.subr.mxu0 0.0
    %267 = vmatpush1.xpose.msra.mxu0 0.0
    %268 = vmatprep.subr.mxu0 0.0
    %269 = vmatpush1.xpose.msra.mxu0 0.0
    %270 = vmatprep.subr.mxu0 0.0
    %271 = vmatpush1.xpose.msra.mxu0 0.0
    %272 = vmatprep.subr.mxu0 0.0
    %273 = vmatpush1.xpose.msra.mxu0 0.0
    %274 = vmatprep.subr.mxu0 0.0
    %275 = vmatpush1.xpose.msra.mxu0 0.0
    %276 = vmatprep.mubr.f32.mxu0 0.0
    %277 = vmatmul.mubr.f32.gmra.mrb[0].mxu0 %v204
    %v278 = vpop.f32.mrb[0].mxu0
    %v279 = vadd.f32 0.0, %v278
    %v280 = vpop.f32.mrb[0].mxu0
    %281 = vmatprep.mubr.f32.mxu0 0.0
    %282 = vmatmul.mubr.f32.gmra.mrb[0].mxu0 %v206
    %v283 = vpop.f32.mrb[0].mxu0
    %v284 = vadd.f32 0.0, %v283
    %v285 = vpop.f32.mrb[0].mxu0
    %286 = vdwg.mxu0
    %v287 = vmul.f32 %v279, 0.25
    %v288 = vmul.f32 %v284, 0.25
    %v289 = vsel %vm195, %v287, -1e+30
    %v290 = vsel %vm196, %v288, -1e+30
    %v291 = vsel %vm203, %v289, -inf
    %292 = vmax.xlane.f32.xlu0 %v291
    %v293 = vpop.xlane.xlu0 %292
    %v294 = vsel %vm203, %v290, -inf
    %295 = vmax.xlane.f32.xlu0 %v294
    %v296 = vpop.xlane.xlu0 %295
    %v297 = vsub.f32 %v289, %v293
    %v298 = vsub.f32 %v290, %v296
    %v299 = vmul.f32 %v297, 1.442695
    %v300 = vpow.pop %v299
    %v301 = vmul.f32 %v298, 1.442695
    %v302 = vpow.pop %v301
    %v303 = vsel %vm203, %v300, 0.0
    %304 = vadd.xlane.f32.xlu0 %v303
    %v305 = vpop.xlane.xlu0 %304
    %v306 = vsel %vm203, %v302, 0.0
    %307 = vadd.xlane.f32.xlu0 %v306
    %v308 = vpop.xlane.xlu0 %307
    %v309 = vrcp.pop %v305
    %v310 = vrcp.pop %v308
    %v311 = vmul.f32 %v300, %v309
    %v312 = vmul.f32 %v302, %v310
    %v314 = vsel %vm203, %v311, 0
    %v317 = vsel %vm203, %v312, 0
    %319 = vmatprep.subr.mxu0 0.0
    %320 = vmatpush1.msra.mxu0 %v185
    %321 = vmatprep.subr.mxu0 0.0
    %322 = vmatpush1.msra.mxu0 %v191
    %323 = vmatprep.subr.mxu0 0.0
    %324 = vmatpush1.msra.mxu0 0.0
    %325 = vmatprep.subr.mxu0 0.0
    %326 = vmatpush1.msra.mxu0 0.0
    %327 = vmatprep.subr.mxu0 0.0
    %328 = vmatpush1.msra.mxu0 0.0
    %329 = vmatprep.subr.mxu0 0.0
    %330 = vmatpush1.msra.mxu0 0.0
    %331 = vmatprep.subr.mxu0 0.0
    %332 = vmatpush1.msra.mxu0 0.0
    %333 = vmatprep.subr.mxu0 0.0
    %334 = vmatpush1.msra.mxu0 0.0
    %335 = vmatprep.subr.mxu0 0.0
    %336 = vmatpush1.msra.mxu0 0.0
    %337 = vmatprep.subr.mxu0 0.0
    %338 = vmatpush1.msra.mxu0 0.0
    %339 = vmatprep.subr.mxu0 0.0
    %340 = vmatpush1.msra.mxu0 0.0
    %341 = vmatprep.subr.mxu0 0.0
    %342 = vmatpush1.msra.mxu0 0.0
    %343 = vmatprep.subr.mxu0 0.0
    %344 = vmatpush1.msra.mxu0 0.0
    %345 = vmatprep.subr.mxu0 0.0
    %346 = vmatpush1.msra.mxu0 0.0
    %347 = vmatprep.subr.mxu0 0.0
    %348 = vmatpush1.msra.mxu0 0.0
    %349 = vmatprep.subr.mxu0 0.0
    %350 = vmatpush1.msra.mxu0 0.0
    %351 = vmatprep.subr.mxu0 0.0
    %352 = vmatpush1.msra.mxu0 0.0
    %353 = vmatprep.subr.mxu0 0.0
    %354 = vmatpush1.msra.mxu0 0.0
    %355 = vmatprep.subr.mxu0 0.0
    %356 = vmatpush1.msra.mxu0 0.0
    %357 = vmatprep.subr.mxu0 0.0
    %358 = vmatpush1.msra.mxu0 0.0
    %359 = vmatprep.subr.mxu0 0.0
    %360 = vmatpush1.msra.mxu0 0.0
    %361 = vmatprep.subr.mxu0 0.0
    %362 = vmatpush1.msra.mxu0 0.0
    %363 = vmatprep.subr.mxu0 0.0
    %364 = vmatpush1.msra.mxu0 0.0
    %365 = vmatprep.subr.mxu0 0.0
    %366 = vmatpush1.msra.mxu0 0.0
    %367 = vmatprep.subr.mxu0 0.0
    %368 = vmatpush1.msra.mxu0 0.0
    %369 = vmatprep.subr.mxu0 0.0
    %370 = vmatpush1.msra.mxu0 0.0
    %371 = vmatprep.subr.mxu0 0.0
    %372 = vmatpush1.msra.mxu0 0.0
    %373 = vmatprep.subr.mxu0 0.0
    %374 = vmatpush1.msra.mxu0 0.0
    %375 = vmatprep.subr.mxu0 0.0
    %376 = vmatpush1.msra.mxu0 0.0
    %377 = vmatprep.subr.mxu0 0.0
    %378 = vmatpush1.msra.mxu0 0.0
    %379 = vmatprep.subr.mxu0 0.0
    %380 = vmatpush1.msra.mxu0 0.0
    %381 = vmatprep.subr.mxu0 0.0
    %382 = vmatpush1.msra.mxu0 0.0
    %383 = vmatprep.mubr.f32.mxu0 0.0
    %384 = vmatmul.mubr.f32.gmra.mrb[0].mxu0 %v314
    %v385 = vpop.f32.mrb[0].mxu0
    %v386 = vadd.f32 0.0, %v385
    %v387 = vpop.f32.mrb[0].mxu0
    %388 = vmatprep.mubr.f32.mxu0 0.0
    %389 = vmatmul.mubr.f32.gmra.mrb[0].mxu0 %v317
    %v390 = vpop.f32.mrb[0].mxu0
    %v391 = vadd.f32 0.0, %v390
    %v392 = vpop.f32.mrb[0].mxu0
    %393 = vdwg.mxu0
    %394 = vrot.lane.b32.xlu0 %v183, 112
    %v395 = vpop.permute.xlu0 %394
    %396 = vrot.lane.b32.xlu0 %v189, 112
    %v397 = vpop.permute.xlu0 %396
    %398 = vrot.lane.b32.xlu0 %v183, 48
    %v399 = vpop.permute.xlu0 %398
    %400 = vrot.lane.b32.xlu0 %v189, 48
    %v401 = vpop.permute.xlu0 %400
    %v402 = vsel %vm203, %v395, 0
    %v404 = vsel %vm203, %v397, 0
    %v406 = vsel %vm203, %v399, 0
    %v408 = vsel %vm203, %v401, 0
    %410 = vmatprep.subr.mxu0 0.0
    %411 = vmatpush1.xpose.msra.mxu0 %v406
    %412 = vmatprep.subr.mxu0 0.0
    %413 = vmatpush1.xpose.msra.mxu0 %v408
    %414 = vmatprep.subr.mxu0 0.0
    %415 = vmatpush1.xpose.msra.mxu0 0.0
    %416 = vmatprep.subr.mxu0 0.0
    %417 = vmatpush1.xpose.msra.mxu0 0.0
    %418 = vmatprep.subr.mxu0 0.0
    %419 = vmatpush1.xpose.msra.mxu0 0.0
    %420 = vmatprep.subr.mxu0 0.0
    %421 = vmatpush1.xpose.msra.mxu0 0.0
    %422 = vmatprep.subr.mxu0 0.0
    %423 = vmatpush1.xpose.msra.mxu0 0.0
    %424 = vmatprep.subr.mxu0 0.0
    %425 = vmatpush1.xpose.msra.mxu0 0.0
    %426 = vmatprep.subr.mxu0 0.0
    %427 = vmatpush1.xpose.msra.mxu0 0.0
    %428 = vmatprep.subr.mxu0 0.0
    %429 = vmatpush1.xpose.msra.mxu0 0.0
    %430 = vmatprep.subr.mxu0 0.0
    %431 = vmatpush1.xpose.msra.mxu0 0.0
    %432 = vmatprep.subr.mxu0 0.0
    %433 = vmatpush1.xpose.msra.mxu0 0.0
    %434 = vmatprep.subr.mxu0 0.0
    %435 = vmatpush1.xpose.msra.mxu0 0.0
    %436 = vmatprep.subr.mxu0 0.0
    %437 = vmatpush1.xpose.msra.mxu0 0.0
    %438 = vmatprep.subr.mxu0 0.0
    %439 = vmatpush1.xpose.msra.mxu0 0.0
    %440 = vmatprep.subr.mxu0 0.0
    %441 = vmatpush1.xpose.msra.mxu0 0.0
    %442 = vmatprep.subr.mxu0 0.0
    %443 = vmatpush1.xpose.msra.mxu0 0.0
    %444 = vmatprep.subr.mxu0 0.0
    %445 = vmatpush1.xpose.msra.mxu0 0.0
    %446 = vmatprep.subr.mxu0 0.0
    %447 = vmatpush1.xpose.msra.mxu0 0.0
    %448 = vmatprep.subr.mxu0 0.0
    %449 = vmatpush1.xpose.msra.mxu0 0.0
    %450 = vmatprep.subr.mxu0 0.0
    %451 = vmatpush1.xpose.msra.mxu0 0.0
    %452 = vmatprep.subr.mxu0 0.0
    %453 = vmatpush1.xpose.msra.mxu0 0.0
    %454 = vmatprep.subr.mxu0 0.0
    %455 = vmatpush1.xpose.msra.mxu0 0.0
    %456 = vmatprep.subr.mxu0 0.0
    %457 = vmatpush1.xpose.msra.mxu0 0.0
    %458 = vmatprep.subr.mxu0 0.0
    %459 = vmatpush1.xpose.msra.mxu0 0.0
    %460 = vmatprep.subr.mxu0 0.0
    %461 = vmatpush1.xpose.msra.mxu0 0.0
    %462 = vmatprep.subr.mxu0 0.0
    %463 = vmatpush1.xpose.msra.mxu0 0.0
    %464 = vmatprep.subr.mxu0 0.0
    %465 = vmatpush1.xpose.msra.mxu0 0.0
    %466 = vmatprep.subr.mxu0 0.0
    %467 = vmatpush1.xpose.msra.mxu0 0.0
    %468 = vmatprep.subr.mxu0 0.0
    %469 = vmatpush1.xpose.msra.mxu0 0.0
    %470 = vmatprep.subr.mxu0 0.0
    %471 = vmatpush1.xpose.msra.mxu0 0.0
    %472 = vmatprep.subr.mxu0 0.0
    %473 = vmatpush1.xpose.msra.mxu0 0.0
    %474 = vmatprep.mubr.f32.mxu0 0.0
    %475 = vmatmul.mubr.f32.gmra.mrb[0].mxu0 %v402
    %v476 = vpop.f32.mrb[0].mxu0
    %v477 = vadd.f32 0.0, %v476
    %v478 = vpop.f32.mrb[0].mxu0
    %479 = vmatprep.mubr.f32.mxu0 0.0
    %480 = vmatmul.mubr.f32.gmra.mrb[0].mxu0 %v404
    %v481 = vpop.f32.mrb[0].mxu0
    %v482 = vadd.f32 0.0, %v481
    %v483 = vpop.f32.mrb[0].mxu0
    %484 = vdwg.mxu0
    %v485 = vmul.f32 %v477, 0.25
    %v486 = vmul.f32 %v482, 0.25
    %v487 = vsel %vm195, %v485, -1e+30
    %v488 = vsel %vm196, %v486, -1e+30
    %v489 = vsel %vm203, %v487, -inf
    %490 = vmax.xlane.f32.xlu0 %v489
    %v491 = vpop.xlane.xlu0 %490
    %v492 = vsel %vm203, %v488, -inf
    %493 = vmax.xlane.f32.xlu0 %v492
    %v494 = vpop.xlane.xlu0 %493
    %v495 = vsub.f32 %v487, %v491
    %v496 = vsub.f32 %v488, %v494
    %v497 = vmul.f32 %v495, 1.442695
    %v498 = vpow.pop %v497
    %v499 = vmul.f32 %v496, 1.442695
    %v500 = vpow.pop %v499
    %v501 = vsel %vm203, %v498, 0.0
    %502 = vadd.xlane.f32.xlu0 %v501
    %v503 = vpop.xlane.xlu0 %502
    %v504 = vsel %vm203, %v500, 0.0
    %505 = vadd.xlane.f32.xlu0 %v504
    %v506 = vpop.xlane.xlu0 %505
    %v507 = vrcp.pop %v503
    %v508 = vrcp.pop %v506
    %v509 = vmul.f32 %v498, %v507
    %v510 = vmul.f32 %v500, %v508
    %513 = vrot.lane.b32.xlu0 %v185, 112
    %v514 = vpop.permute.xlu0 %513
    %515 = vrot.lane.b32.xlu0 %v191, 112
    %v516 = vpop.permute.xlu0 %515
    %v520 = vsel %vm203, %v509, 0
    %v523 = vsel %vm203, %v510, 0
    %525 = vmatprep.subr.mxu0 0.0
    %526 = vmatpush1.msra.mxu0 %v514
    %527 = vmatprep.subr.mxu0 0.0
    %528 = vmatpush1.msra.mxu0 %v516
    %529 = vmatprep.subr.mxu0 0.0
    %530 = vmatpush1.msra.mxu0 0.0
    %531 = vmatprep.subr.mxu0 0.0
    %532 = vmatpush1.msra.mxu0 0.0
    %533 = vmatprep.subr.mxu0 0.0
    %534 = vmatpush1.msra.mxu0 0.0
    %535 = vmatprep.subr.mxu0 0.0
    %536 = vmatpush1.msra.mxu0 0.0
    %537 = vmatprep.subr.mxu0 0.0
    %538 = vmatpush1.msra.mxu0 0.0
    %539 = vmatprep.subr.mxu0 0.0
    %540 = vmatpush1.msra.mxu0 0.0
    %541 = vmatprep.subr.mxu0 0.0
    %542 = vmatpush1.msra.mxu0 0.0
    %543 = vmatprep.subr.mxu0 0.0
    %544 = vmatpush1.msra.mxu0 0.0
    %545 = vmatprep.subr.mxu0 0.0
    %546 = vmatpush1.msra.mxu0 0.0
    %547 = vmatprep.subr.mxu0 0.0
    %548 = vmatpush1.msra.mxu0 0.0
    %549 = vmatprep.subr.mxu0 0.0
    %550 = vmatpush1.msra.mxu0 0.0
    %551 = vmatprep.subr.mxu0 0.0
    %552 = vmatpush1.msra.mxu0 0.0
    %553 = vmatprep.subr.mxu0 0.0
    %554 = vmatpush1.msra.mxu0 0.0
    %555 = vmatprep.subr.mxu0 0.0
    %556 = vmatpush1.msra.mxu0 0.0
    %557 = vmatprep.subr.mxu0 0.0
    %558 = vmatpush1.msra.mxu0 0.0
    %559 = vmatprep.subr.mxu0 0.0
    %560 = vmatpush1.msra.mxu0 0.0
    %561 = vmatprep.subr.mxu0 0.0
    %562 = vmatpush1.msra.mxu0 0.0
    %563 = vmatprep.subr.mxu0 0.0
    %564 = vmatpush1.msra.mxu0 0.0
    %565 = vmatprep.subr.mxu0 0.0
    %566 = vmatpush1.msra.mxu0 0.0
    %567 = vmatprep.subr.mxu0 0.0
    %568 = vmatpush1.msra.mxu0 0.0
    %569 = vmatprep.subr.mxu0 0.0
    %570 = vmatpush1.msra.mxu0 0.0
    %571 = vmatprep.subr.mxu0 0.0
    %572 = vmatpush1.msra.mxu0 0.0
    %573 = vmatprep.subr.mxu0 0.0
    %574 = vmatpush1.msra.mxu0 0.0
    %575 = vmatprep.subr.mxu0 0.0
    %576 = vmatpush1.msra.mxu0 0.0
    %577 = vmatprep.subr.mxu0 0.0
    %578 = vmatpush1.msra.mxu0 0.0
    %579 = vmatprep.subr.mxu0 0.0
    %580 = vmatpush1.msra.mxu0 0.0
    %581 = vmatprep.subr.mxu0 0.0
    %582 = vmatpush1.msra.mxu0 0.0
    %583 = vmatprep.subr.mxu0 0.0
    %584 = vmatpush1.msra.mxu0 0.0
    %585 = vmatprep.subr.mxu0 0.0
    %586 = vmatpush1.msra.mxu0 0.0
    %587 = vmatprep.subr.mxu0 0.0
    %588 = vmatpush1.msra.mxu0 0.0
    %589 = vmatprep.mubr.f32.mxu0 0.0
    %590 = vmatmul.mubr.f32.gmra.mrb[0].mxu0 %v520
    %v591 = vpop.f32.mrb[0].mxu0
    %v592 = vadd.f32 0.0, %v591
    %v593 = vpop.f32.mrb[0].mxu0
    %594 = vmatprep.mubr.f32.mxu0 0.0
    %595 = vmatmul.mubr.f32.gmra.mrb[0].mxu0 %v523
    %v596 = vpop.f32.mrb[0].mxu0
    %v597 = vadd.f32 0.0, %v596
    %v598 = vpop.f32.mrb[0].mxu0
    %599 = vdwg.mxu0
    %600 = vrot.lane.b32.xlu0 %v183, 96
    %v601 = vpop.permute.xlu0 %600
    %602 = vrot.lane.b32.xlu0 %v189, 96
    %v603 = vpop.permute.xlu0 %602
    %604 = vrot.lane.b32.xlu0 %v183, 32
    %v605 = vpop.permute.xlu0 %604
    %606 = vrot.lane.b32.xlu0 %v189, 32
    %v607 = vpop.permute.xlu0 %606
    %v608 = vsel %vm203, %v601, 0
    %v610 = vsel %vm203, %v603, 0
    %v612 = vsel %vm203, %v605, 0
    %v614 = vsel %vm203, %v607, 0
    %616 = vmatprep.subr.mxu0 0.0
    %617 = vmatpush1.xpose.msra.mxu0 %v612
    %618 = vmatprep.subr.mxu0 0.0
    %619 = vmatpush1.xpose.msra.mxu0 %v614
    %620 = vmatprep.subr.mxu0 0.0
    %621 = vmatpush1.xpose.msra.mxu0 0.0
    %622 = vmatprep.subr.mxu0 0.0
    %623 = vmatpush1.xpose.msra.mxu0 0.0
    %624 = vmatprep.subr.mxu0 0.0
    %625 = vmatpush1.xpose.msra.mxu0 0.0
    %626 = vmatprep.subr.mxu0 0.0
    %627 = vmatpush1.xpose.msra.mxu0 0.0
    %628 = vmatprep.subr.mxu0 0.0
    %629 = vmatpush1.xpose.msra.mxu0 0.0
    %630 = vmatprep.subr.mxu0 0.0
    %631 = vmatpush1.xpose.msra.mxu0 0.0
    %632 = vmatprep.subr.mxu0 0.0
    %633 = vmatpush1.xpose.msra.mxu0 0.0
    %634 = vmatprep.subr.mxu0 0.0
    %635 = vmatpush1.xpose.msra.mxu0 0.0
    %636 = vmatprep.subr.mxu0 0.0
    %637 = vmatpush1.xpose.msra.mxu0 0.0
    %638 = vmatprep.subr.mxu0 0.0
    %639 = vmatpush1.xpose.msra.mxu0 0.0
    %640 = vmatprep.subr.mxu0 0.0
    %641 = vmatpush1.xpose.msra.mxu0 0.0
    %642 = vmatprep.subr.mxu0 0.0
    %643 = vmatpush1.xpose.msra.mxu0 0.0
    %644 = vmatprep.subr.mxu0 0.0
    %645 = vmatpush1.xpose.msra.mxu0 0.0
    %646 = vmatprep.subr.mxu0 0.0
    %647 = vmatpush1.xpose.msra.mxu0 0.0
    %648 = vmatprep.subr.mxu0 0.0
    %649 = vmatpush1.xpose.msra.mxu0 0.0
    %650 = vmatprep.subr.mxu0 0.0
    %651 = vmatpush1.xpose.msra.mxu0 0.0
    %652 = vmatprep.subr.mxu0 0.0
    %653 = vmatpush1.xpose.msra.mxu0 0.0
    %654 = vmatprep.subr.mxu0 0.0
    %655 = vmatpush1.xpose.msra.mxu0 0.0
    %656 = vmatprep.subr.mxu0 0.0
    %657 = vmatpush1.xpose.msra.mxu0 0.0
    %658 = vmatprep.subr.mxu0 0.0
    %659 = vmatpush1.xpose.msra.mxu0 0.0
    %660 = vmatprep.subr.mxu0 0.0
    %661 = vmatpush1.xpose.msra.mxu0 0.0
    %662 = vmatprep.subr.mxu0 0.0
    %663 = vmatpush1.xpose.msra.mxu0 0.0
    %664 = vmatprep.subr.mxu0 0.0
    %665 = vmatpush1.xpose.msra.mxu0 0.0
    %666 = vmatprep.subr.mxu0 0.0
    %667 = vmatpush1.xpose.msra.mxu0 0.0
    %668 = vmatprep.subr.mxu0 0.0
    %669 = vmatpush1.xpose.msra.mxu0 0.0
    %670 = vmatprep.subr.mxu0 0.0
    %671 = vmatpush1.xpose.msra.mxu0 0.0
    %672 = vmatprep.subr.mxu0 0.0
    %673 = vmatpush1.xpose.msra.mxu0 0.0
    %674 = vmatprep.subr.mxu0 0.0
    %675 = vmatpush1.xpose.msra.mxu0 0.0
    %676 = vmatprep.subr.mxu0 0.0
    %677 = vmatpush1.xpose.msra.mxu0 0.0
    %678 = vmatprep.subr.mxu0 0.0
    %679 = vmatpush1.xpose.msra.mxu0 0.0
    %680 = vmatprep.mubr.f32.mxu0 0.0
    %681 = vmatmul.mubr.f32.gmra.mrb[0].mxu0 %v608
    %v682 = vpop.f32.mrb[0].mxu0
    %v683 = vadd.f32 0.0, %v682
    %v684 = vpop.f32.mrb[0].mxu0
    %685 = vmatprep.mubr.f32.mxu0 0.0
    %686 = vmatmul.mubr.f32.gmra.mrb[0].mxu0 %v610
    %v687 = vpop.f32.mrb[0].mxu0
    %v688 = vadd.f32 0.0, %v687
    %v689 = vpop.f32.mrb[0].mxu0
    %690 = vdwg.mxu0
    %v691 = vmul.f32 %v683, 0.25
    %v692 = vmul.f32 %v688, 0.25
    %v693 = vsel %vm195, %v691, -1e+30
    %v694 = vsel %vm196, %v692, -1e+30
    %v695 = vsel %vm203, %v693, -inf
    %696 = vmax.xlane.f32.xlu0 %v695
    %v697 = vpop.xlane.xlu0 %696
    %v698 = vsel %vm203, %v694, -inf
    %699 = vmax.xlane.f32.xlu0 %v698
    %v700 = vpop.xlane.xlu0 %699
    %v701 = vsub.f32 %v693, %v697
    %v702 = vsub.f32 %v694, %v700
    %v703 = vmul.f32 %v701, 1.442695
    %v704 = vpow.pop %v703
    %v705 = vmul.f32 %v702, 1.442695
    %v706 = vpow.pop %v705
    %v707 = vsel %vm203, %v704, 0.0
    %708 = vadd.xlane.f32.xlu0 %v707
    %v709 = vpop.xlane.xlu0 %708
    %v710 = vsel %vm203, %v706, 0.0
    %711 = vadd.xlane.f32.xlu0 %v710
    %v712 = vpop.xlane.xlu0 %711
    %v713 = vrcp.pop %v709
    %v714 = vrcp.pop %v712
    %v715 = vmul.f32 %v704, %v713
    %v716 = vmul.f32 %v706, %v714
    %717 = vrot.lane.b32.xlu0 %v185, 96
    %v718 = vpop.permute.xlu0 %717
    %719 = vrot.lane.b32.xlu0 %v191, 96
    %v720 = vpop.permute.xlu0 %719
    %v724 = vsel %vm203, %v715, 0
    %v727 = vsel %vm203, %v716, 0
    %729 = vmatprep.subr.mxu0 0.0
    %730 = vmatpush1.msra.mxu0 %v718
    %731 = vmatprep.subr.mxu0 0.0
    %732 = vmatpush1.msra.mxu0 %v720
    %733 = vmatprep.subr.mxu0 0.0
    %734 = vmatpush1.msra.mxu0 0.0
    %735 = vmatprep.subr.mxu0 0.0
    %736 = vmatpush1.msra.mxu0 0.0
    %737 = vmatprep.subr.mxu0 0.0
    %738 = vmatpush1.msra.mxu0 0.0
    %739 = vmatprep.subr.mxu0 0.0
    %740 = vmatpush1.msra.mxu0 0.0
    %741 = vmatprep.subr.mxu0 0.0
    %742 = vmatpush1.msra.mxu0 0.0
    %743 = vmatprep.subr.mxu0 0.0
    %744 = vmatpush1.msra.mxu0 0.0
    %745 = vmatprep.subr.mxu0 0.0
    %746 = vmatpush1.msra.mxu0 0.0
    %747 = vmatprep.subr.mxu0 0.0
    %748 = vmatpush1.msra.mxu0 0.0
    %749 = vmatprep.subr.mxu0 0.0
    %750 = vmatpush1.msra.mxu0 0.0
    %751 = vmatprep.subr.mxu0 0.0
    %752 = vmatpush1.msra.mxu0 0.0
    %753 = vmatprep.subr.mxu0 0.0
    %754 = vmatpush1.msra.mxu0 0.0
    %755 = vmatprep.subr.mxu0 0.0
    %756 = vmatpush1.msra.mxu0 0.0
    %757 = vmatprep.subr.mxu0 0.0
    %758 = vmatpush1.msra.mxu0 0.0
    %759 = vmatprep.subr.mxu0 0.0
    %760 = vmatpush1.msra.mxu0 0.0
    %761 = vmatprep.subr.mxu0 0.0
    %762 = vmatpush1.msra.mxu0 0.0
    %763 = vmatprep.subr.mxu0 0.0
    %764 = vmatpush1.msra.mxu0 0.0
    %765 = vmatprep.subr.mxu0 0.0
    %766 = vmatpush1.msra.mxu0 0.0
    %767 = vmatprep.subr.mxu0 0.0
    %768 = vmatpush1.msra.mxu0 0.0
    %769 = vmatprep.subr.mxu0 0.0
    %770 = vmatpush1.msra.mxu0 0.0
    %771 = vmatprep.subr.mxu0 0.0
    %772 = vmatpush1.msra.mxu0 0.0
    %773 = vmatprep.subr.mxu0 0.0
    %774 = vmatpush1.msra.mxu0 0.0
    %775 = vmatprep.subr.mxu0 0.0
    %776 = vmatpush1.msra.mxu0 0.0
    %777 = vmatprep.subr.mxu0 0.0
    %778 = vmatpush1.msra.mxu0 0.0
    %779 = vmatprep.subr.mxu0 0.0
    %780 = vmatpush1.msra.mxu0 0.0
    %781 = vmatprep.subr.mxu0 0.0
    %782 = vmatpush1.msra.mxu0 0.0
    %783 = vmatprep.subr.mxu0 0.0
    %784 = vmatpush1.msra.mxu0 0.0
    %785 = vmatprep.subr.mxu0 0.0
    %786 = vmatpush1.msra.mxu0 0.0
    %787 = vmatprep.subr.mxu0 0.0
    %788 = vmatpush1.msra.mxu0 0.0
    %789 = vmatprep.subr.mxu0 0.0
    %790 = vmatpush1.msra.mxu0 0.0
    %791 = vmatprep.subr.mxu0 0.0
    %792 = vmatpush1.msra.mxu0 0.0
    %793 = vmatprep.mubr.f32.mxu0 0.0
    %794 = vmatmul.mubr.f32.gmra.mrb[0].mxu0 %v724
    %v795 = vpop.f32.mrb[0].mxu0
    %v796 = vadd.f32 0.0, %v795
    %v797 = vpop.f32.mrb[0].mxu0
    %798 = vmatprep.mubr.f32.mxu0 0.0
    %799 = vmatmul.mubr.f32.gmra.mrb[0].mxu0 %v727
    %v800 = vpop.f32.mrb[0].mxu0
    %v801 = vadd.f32 0.0, %v800
    %v802 = vpop.f32.mrb[0].mxu0
    %803 = vdwg.mxu0
    %804 = vrot.lane.b32.xlu0 %v183, 80
    %v805 = vpop.permute.xlu0 %804
    %806 = vrot.lane.b32.xlu0 %v189, 80
    %v807 = vpop.permute.xlu0 %806
    %808 = vrot.lane.b32.xlu0 %v183, 16
    %v809 = vpop.permute.xlu0 %808
    %810 = vrot.lane.b32.xlu0 %v189, 16
    %v811 = vpop.permute.xlu0 %810
    %v812 = vsel %vm203, %v805, 0
    %v814 = vsel %vm203, %v807, 0
    %v816 = vsel %vm203, %v809, 0
    %v818 = vsel %vm203, %v811, 0
    %820 = vmatprep.subr.mxu0 0.0
    %821 = vmatpush1.xpose.msra.mxu0 %v816
    %822 = vmatprep.subr.mxu0 0.0
    %823 = vmatpush1.xpose.msra.mxu0 %v818
    %824 = vmatprep.subr.mxu0 0.0
    %825 = vmatpush1.xpose.msra.mxu0 0.0
    %826 = vmatprep.subr.mxu0 0.0
    %827 = vmatpush1.xpose.msra.mxu0 0.0
    %828 = vmatprep.subr.mxu0 0.0
    %829 = vmatpush1.xpose.msra.mxu0 0.0
    %830 = vmatprep.subr.mxu0 0.0
    %831 = vmatpush1.xpose.msra.mxu0 0.0
    %832 = vmatprep.subr.mxu0 0.0
    %833 = vmatpush1.xpose.msra.mxu0 0.0
    %834 = vmatprep.subr.mxu0 0.0
    %835 = vmatpush1.xpose.msra.mxu0 0.0
    %836 = vmatprep.subr.mxu0 0.0
    %837 = vmatpush1.xpose.msra.mxu0 0.0
    %838 = vmatprep.subr.mxu0 0.0
    %839 = vmatpush1.xpose.msra.mxu0 0.0
    %840 = vmatprep.subr.mxu0 0.0
    %841 = vmatpush1.xpose.msra.mxu0 0.0
    %842 = vmatprep.subr.mxu0 0.0
    %843 = vmatpush1.xpose.msra.mxu0 0.0
    %844 = vmatprep.subr.mxu0 0.0
    %845 = vmatpush1.xpose.msra.mxu0 0.0
    %846 = vmatprep.subr.mxu0 0.0
    %847 = vmatpush1.xpose.msra.mxu0 0.0
    %848 = vmatprep.subr.mxu0 0.0
    %849 = vmatpush1.xpose.msra.mxu0 0.0
    %850 = vmatprep.subr.mxu0 0.0
    %851 = vmatpush1.xpose.msra.mxu0 0.0
    %852 = vmatprep.subr.mxu0 0.0
    %853 = vmatpush1.xpose.msra.mxu0 0.0
    %854 = vmatprep.subr.mxu0 0.0
    %855 = vmatpush1.xpose.msra.mxu0 0.0
    %856 = vmatprep.subr.mxu0 0.0
    %857 = vmatpush1.xpose.msra.mxu0 0.0
    %858 = vmatprep.subr.mxu0 0.0
    %859 = vmatpush1.xpose.msra.mxu0 0.0
    %860 = vmatprep.subr.mxu0 0.0
    %861 = vmatpush1.xpose.msra.mxu0 0.0
    %862 = vmatprep.subr.mxu0 0.0
    %863 = vmatpush1.xpose.msra.mxu0 0.0
    %864 = vmatprep.subr.mxu0 0.0
    %865 = vmatpush1.xpose.msra.mxu0 0.0
    %866 = vmatprep.subr.mxu0 0.0
    %867 = vmatpush1.xpose.msra.mxu0 0.0
    %868 = vmatprep.subr.mxu0 0.0
    %869 = vmatpush1.xpose.msra.mxu0 0.0
    %870 = vmatprep.subr.mxu0 0.0
    %871 = vmatpush1.xpose.msra.mxu0 0.0
    %872 = vmatprep.subr.mxu0 0.0
    %873 = vmatpush1.xpose.msra.mxu0 0.0
    %874 = vmatprep.subr.mxu0 0.0
    %875 = vmatpush1.xpose.msra.mxu0 0.0
    %876 = vmatprep.subr.mxu0 0.0
    %877 = vmatpush1.xpose.msra.mxu0 0.0
    %878 = vmatprep.subr.mxu0 0.0
    %879 = vmatpush1.xpose.msra.mxu0 0.0
    %880 = vmatprep.subr.mxu0 0.0
    %881 = vmatpush1.xpose.msra.mxu0 0.0
    %882 = vmatprep.subr.mxu0 0.0
    %883 = vmatpush1.xpose.msra.mxu0 0.0
    %884 = vmatprep.mubr.f32.mxu0 0.0
    %885 = vmatmul.mubr.f32.gmra.mrb[0].mxu0 %v812
    %v886 = vpop.f32.mrb[0].mxu0
    %v887 = vadd.f32 0.0, %v886
    %v888 = vpop.f32.mrb[0].mxu0
    %889 = vmatprep.mubr.f32.mxu0 0.0
    %890 = vmatmul.mubr.f32.gmra.mrb[0].mxu0 %v814
    %v891 = vpop.f32.mrb[0].mxu0
    %v892 = vadd.f32 0.0, %v891
    %v893 = vpop.f32.mrb[0].mxu0
    %894 = vdwg.mxu0
    %v895 = vmul.f32 %v887, 0.25
    %v896 = vmul.f32 %v892, 0.25
    %v897 = vsel %vm195, %v895, -1e+30
    %v898 = vsel %vm196, %v896, -1e+30
    %v899 = vsel %vm203, %v897, -inf
    %900 = vmax.xlane.f32.xlu0 %v899
    %v901 = vpop.xlane.xlu0 %900
    %v902 = vsel %vm203, %v898, -inf
    %903 = vmax.xlane.f32.xlu0 %v902
    %v904 = vpop.xlane.xlu0 %903
    %v905 = vsub.f32 %v897, %v901
    %v906 = vsub.f32 %v898, %v904
    %v907 = vmul.f32 %v905, 1.442695
    %v908 = vpow.pop %v907
    %v909 = vmul.f32 %v906, 1.442695
    %v910 = vpow.pop %v909
    %v911 = vsel %vm203, %v908, 0.0
    %912 = vadd.xlane.f32.xlu0 %v911
    %v913 = vpop.xlane.xlu0 %912
    %v914 = vsel %vm203, %v910, 0.0
    %915 = vadd.xlane.f32.xlu0 %v914
    %v916 = vpop.xlane.xlu0 %915
    %v917 = vrcp.pop %v913
    %v918 = vrcp.pop %v916
    %v919 = vmul.f32 %v908, %v917
    %v920 = vmul.f32 %v910, %v918
    %921 = vrot.lane.b32.xlu0 %v185, 80
    %v922 = vpop.permute.xlu0 %921
    %923 = vrot.lane.b32.xlu0 %v191, 80
    %v924 = vpop.permute.xlu0 %923
    %v928 = vsel %vm203, %v919, 0
    %v931 = vsel %vm203, %v920, 0
    %933 = vmatprep.subr.mxu0 0.0
    %934 = vmatpush1.msra.mxu0 %v922
    %935 = vmatprep.subr.mxu0 0.0
    %936 = vmatpush1.msra.mxu0 %v924
    %937 = vmatprep.subr.mxu0 0.0
    %938 = vmatpush1.msra.mxu0 0.0
    %939 = vmatprep.subr.mxu0 0.0
    %940 = vmatpush1.msra.mxu0 0.0
    %941 = vmatprep.subr.mxu0 0.0
    %942 = vmatpush1.msra.mxu0 0.0
    %943 = vmatprep.subr.mxu0 0.0
    %944 = vmatpush1.msra.mxu0 0.0
    %945 = vmatprep.subr.mxu0 0.0
    %946 = vmatpush1.msra.mxu0 0.0
    %947 = vmatprep.subr.mxu0 0.0
    %948 = vmatpush1.msra.mxu0 0.0
    %949 = vmatprep.subr.mxu0 0.0
    %950 = vmatpush1.msra.mxu0 0.0
    %951 = vmatprep.subr.mxu0 0.0
    %952 = vmatpush1.msra.mxu0 0.0
    %953 = vmatprep.subr.mxu0 0.0
    %954 = vmatpush1.msra.mxu0 0.0
    %955 = vmatprep.subr.mxu0 0.0
    %956 = vmatpush1.msra.mxu0 0.0
    %957 = vmatprep.subr.mxu0 0.0
    %958 = vmatpush1.msra.mxu0 0.0
    %959 = vmatprep.subr.mxu0 0.0
    %960 = vmatpush1.msra.mxu0 0.0
    %961 = vmatprep.subr.mxu0 0.0
    %962 = vmatpush1.msra.mxu0 0.0
    %963 = vmatprep.subr.mxu0 0.0
    %964 = vmatpush1.msra.mxu0 0.0
    %965 = vmatprep.subr.mxu0 0.0
    %966 = vmatpush1.msra.mxu0 0.0
    %967 = vmatprep.subr.mxu0 0.0
    %968 = vmatpush1.msra.mxu0 0.0
    %969 = vmatprep.subr.mxu0 0.0
    %970 = vmatpush1.msra.mxu0 0.0
    %971 = vmatprep.subr.mxu0 0.0
    %972 = vmatpush1.msra.mxu0 0.0
    %973 = vmatprep.subr.mxu0 0.0
    %974 = vmatpush1.msra.mxu0 0.0
    %975 = vmatprep.subr.mxu0 0.0
    %976 = vmatpush1.msra.mxu0 0.0
    %977 = vmatprep.subr.mxu0 0.0
    %978 = vmatpush1.msra.mxu0 0.0
    %979 = vmatprep.subr.mxu0 0.0
    %980 = vmatpush1.msra.mxu0 0.0
    %981 = vmatprep.subr.mxu0 0.0
    %982 = vmatpush1.msra.mxu0 0.0
    %983 = vmatprep.subr.mxu0 0.0
    %984 = vmatpush1.msra.mxu0 0.0
    %985 = vmatprep.subr.mxu0 0.0
    %986 = vmatpush1.msra.mxu0 0.0
    %987 = vmatprep.subr.mxu0 0.0
    %988 = vmatpush1.msra.mxu0 0.0
    %989 = vmatprep.subr.mxu0 0.0
    %990 = vmatpush1.msra.mxu0 0.0
    %991 = vmatprep.subr.mxu0 0.0
    %992 = vmatpush1.msra.mxu0 0.0
    %993 = vmatprep.subr.mxu0 0.0
    %994 = vmatpush1.msra.mxu0 0.0
    %995 = vmatprep.subr.mxu0 0.0
    %996 = vmatpush1.msra.mxu0 0.0
    %997 = vmatprep.mubr.f32.mxu0 0.0
    %998 = vmatmul.mubr.f32.gmra.mrb[0].mxu0 %v928
    %v999 = vpop.f32.mrb[0].mxu0
    %v1000 = vadd.f32 0.0, %v999
    %v1001 = vpop.f32.mrb[0].mxu0
    %1002 = vmatprep.mubr.f32.mxu0 0.0
    %1003 = vmatmul.mubr.f32.gmra.mrb[0].mxu0 %v931
    %v1004 = vpop.f32.mrb[0].mxu0
    %v1005 = vadd.f32 0.0, %v1004
    %v1006 = vpop.f32.mrb[0].mxu0
    %1007 = vdwg.mxu0
    %1010 = vrot.lane.b32.xlu0 %v592, 16
    %v1011 = vpop.permute.xlu0 %1010
    %1012 = vrot.lane.b32.xlu0 %v597, 16
    %v1013 = vpop.permute.xlu0 %1012
    %1018 = vrot.lane.b32.xlu0 %v796, 32
    %v1019 = vpop.permute.xlu0 %1018
    %1020 = vrot.lane.b32.xlu0 %v801, 32
    %v1021 = vpop.permute.xlu0 %1020
    %1026 = vrot.lane.b32.xlu0 %v1000, 48
    %v1027 = vpop.permute.xlu0 %1026
    %1028 = vrot.lane.b32.xlu0 %v1005, 48
    %v1029 = vpop.permute.xlu0 %1028
    %v1032 = vsel %vm203, %v386, %v1011
    %v1033 = vsel %vm203, %v391, %v1013
    %vm1034 = vcmask 261120
    %v1035 = vsel %vm1034, %v1032, %v1019
    %v1036 = vsel %vm1034, %v1033, %v1021
    %vm1037 = vcmask 392192
    %v1038 = vsel %vm1037, %v1035, %v1027
    %v1039 = vsel %vm1037, %v1036, %v1029
    %v1040 = vld [vmem:[#allocation8] sm:$0xff]
    %v1041 = vld [vmem:[#allocation8 + $0x8] sm:$0xff]
    %v1042 = vld [vmem:[#allocation8 + $0x10] sm:$0xff]
    %v1043 = vld [vmem:[#allocation8 + $0x18] sm:$0xff]
    %v1044 = vld [vmem:[#allocation8 + $0x20] sm:$0xff]
    %v1045 = vld [vmem:[#allocation8 + $0x28] sm:$0xff]
    %v1046 = vld [vmem:[#allocation8 + $0x30] sm:$0xff]
    %v1047 = vld [vmem:[#allocation8 + $0x38] sm:$0xff]
    %v1048 = vld [vmem:[%s5] sm:$0x1]
    %v1050 = vlaneseq
    %v1051 = vshrl.u32 %v1050, 7
    %v1052 = vsub.s32 0, %v1051
    %v1053 = vrot.slane %v1048, %v1052
    %v1056 = vsel %vm109, %v1038, 0
    %v1059 = vsel %vm109, %v1039, 0
    %1061 = vmatprep.subr.mxu0 0.0
    %1062 = vmatpush1.msra.mxu0 %v1040
    %1063 = vmatprep.subr.mxu0 0.0
    %1064 = vmatpush1.msra.mxu0 %v1041
    %1065 = vmatprep.subr.mxu0 0.0
    %1066 = vmatpush1.msra.mxu0 %v1042
    %1067 = vmatprep.subr.mxu0 0.0
    %1068 = vmatpush1.msra.mxu0 %v1043
    %1069 = vmatprep.subr.mxu0 0.0
    %1070 = vmatpush1.msra.mxu0 %v1044
    %1071 = vmatprep.subr.mxu0 0.0
    %1072 = vmatpush1.msra.mxu0 %v1045
    %1073 = vmatprep.subr.mxu0 0.0
    %1074 = vmatpush1.msra.mxu0 %v1046
    %1075 = vmatprep.subr.mxu0 0.0
    %1076 = vmatpush1.msra.mxu0 %v1047
    %1077 = vmatprep.subr.mxu0 0.0
    %1078 = vmatpush1.msra.mxu0 0.0
    %1079 = vmatprep.subr.mxu0 0.0
    %1080 = vmatpush1.msra.mxu0 0.0
    %1081 = vmatprep.subr.mxu0 0.0
    %1082 = vmatpush1.msra.mxu0 0.0
    %1083 = vmatprep.subr.mxu0 0.0
    %1084 = vmatpush1.msra.mxu0 0.0
    %1085 = vmatprep.subr.mxu0 0.0
    %1086 = vmatpush1.msra.mxu0 0.0
    %1087 = vmatprep.subr.mxu0 0.0
    %1088 = vmatpush1.msra.mxu0 0.0
    %1089 = vmatprep.subr.mxu0 0.0
    %1090 = vmatpush1.msra.mxu0 0.0
    %1091 = vmatprep.subr.mxu0 0.0
    %1092 = vmatpush1.msra.mxu0 0.0
    %1093 = vmatprep.subr.mxu0 0.0
    %1094 = vmatpush1.msra.mxu0 0.0
    %1095 = vmatprep.subr.mxu0 0.0
    %1096 = vmatpush1.msra.mxu0 0.0
    %1097 = vmatprep.subr.mxu0 0.0
    %1098 = vmatpush1.msra.mxu0 0.0
    %1099 = vmatprep.subr.mxu0 0.0
    %1100 = vmatpush1.msra.mxu0 0.0
    %1101 = vmatprep.subr.mxu0 0.0
    %1102 = vmatpush1.msra.mxu0 0.0
    %1103 = vmatprep.subr.mxu0 0.0
    %1104 = vmatpush1.msra.mxu0 0.0
    %1105 = vmatprep.subr.mxu0 0.0
    %1106 = vmatpush1.msra.mxu0 0.0
    %1107 = vmatprep.subr.mxu0 0.0
    %1108 = vmatpush1.msra.mxu0 0.0
    %1109 = vmatprep.subr.mxu0 0.0
    %1110 = vmatpush1.msra.mxu0 0.0
    %1111 = vmatprep.subr.mxu0 0.0
    %1112 = vmatpush1.msra.mxu0 0.0
    %1113 = vmatprep.subr.mxu0 0.0
    %1114 = vmatpush1.msra.mxu0 0.0
    %1115 = vmatprep.subr.mxu0 0.0
    %1116 = vmatpush1.msra.mxu0 0.0
    %1117 = vmatprep.subr.mxu0 0.0
    %1118 = vmatpush1.msra.mxu0 0.0
    %1119 = vmatprep.subr.mxu0 0.0
    %1120 = vmatpush1.msra.mxu0 0.0
    %1121 = vmatprep.subr.mxu0 0.0
    %1122 = vmatpush1.msra.mxu0 0.0
    %1123 = vmatprep.subr.mxu0 0.0
    %1124 = vmatpush1.msra.mxu0 0.0
    %1125 = vmatprep.mubr.f32.mxu0 0.0
    %1126 = vmatmul.mubr.f32.gmra.mrb[0].mxu0 %v1056
    %v1127 = vpop.f32.mrb[0].mxu0
    %v1128 = vadd.f32 %v1053, %v1127
    %v1129 = vpop.f32.mrb[0].mxu0
    %1130 = vmatprep.mubr.f32.mxu0 0.0
    %1131 = vmatmul.mubr.f32.gmra.mrb[0].mxu0 %v1059
    %v1132 = vpop.f32.mrb[0].mxu0
    %v1133 = vadd.f32 %v1053, %v1132
    %v1134 = vpop.f32.mrb[0].mxu0
    %1135 = vdwg.mxu0
    %1136 = vst.msk [vmem:[#allocation10] sm:$0xff] %vm109, %v1128
    %1137 = vst.msk [vmem:[#allocation10 + $0x8] sm:$0xff] %vm109, %v1133
    // Predicated region
    $region42: #{tpu_custom_call.1} parent=1 // pred_check
      _
    $region43: #{tpu_custom_call.1} parent=1 // pred_check_branch
      %1139 = sbr.rel (0) target = $region45
    $region44: #{tpu_custom_call.1} parent=1 // pred_region
      %s1141 = ssub.s32 256, 256
      %1142 = vsyncadd [#allocation4], %s1141
      %s1143 = sshll.u32 [#allocation10], 4
      %s1144 = int_to_ptr.vmem [resolvable:$true] %s1143
      %1149 = dma.vmem_to_hbm [thread:$0]  %s1144, 256, %s6, [#allocation4], 128, 128, 8
    $region45: #{tpu_custom_call.1} parent=1 // pred_fallthru
      _
    // Predicated region
    $region46: #{tpu_custom_call.1} parent=1 // pred_check
      _
    $region47: #{tpu_custom_call.1} parent=1 // pred_check_branch
      %1151 = sbr.rel (0) target = $region49
    $region48: #{tpu_custom_call.1} parent=1 // pred_region
      %1152 = dma.done [#allocation4], 256
    $region49: #{tpu_custom_call.1} parent=1 // pred_fallthru
      _
    %1153 = vsyncpa [#allocation3], 1
    %1154 = vsyncpa [#allocation6], 1
    %1155 = vsyncpa [#allocation9], 1
    %1156 = vsyncpa [#allocation4], 1

</llo_original>
